<compile_context>
chip_gen: v6e
topology: v6e:2x2x1
jax: 0.10.0
libtpu: 0.0.40
codegen_flags: <defaults>
</compile_context>

<pallas_src>
from functools import partial

import jax
import jax.numpy as jnp
from jax import lax
from jax.experimental import pallas as pl
from jax.experimental.pallas import tpu as pltpu


def _round_up(x, m):
    return -(-x // m) * m


def _td_attention_kernel(v_ref, hq_ref, wv_ref, wa_ref, out_ref, *, k_real):
    tb, kp, v_dim = v_ref.shape
    h2 = wv_ref.shape[1]
    h = h2 // 2
    cdt = wv_ref.dtype  # MXU compute dtype (bf16 or f32)

    # One wide matmul: [W1v|W2v] fused along N (=2H).  kp % 8 == 0 makes this
    # reshape a layout no-op (no hidden relayout copies).
    v2d = v_ref[...].reshape(tb * kp, v_dim)
    if v2d.dtype != cdt:
        v2d = v2d.astype(cdt)
    hv = jnp.dot(v2d, wv_ref[...], preferred_element_type=jnp.float32)  # (tb*kp, 2H)

    # q branch (+ bias) precomputed in the wrapper -> only a broadcast add here.
    pre = hv.reshape(tb, kp, h2) + hq_ref[...][:, None, :]               # (tb, kp, 2H)

    # GatedMLP: relu(branch1) * sigmoid(branch2); sigmoid via one EUP tanh push.
    # TODO(synk): optionally run this elementwise chain in bf16 on v6e/v7x.
    y = jnp.maximum(pre[..., :h], 0.0)
    g = 0.5 * (jnp.tanh(0.5 * pre[..., h:]) + 1.0)
    f_a = y * g                                                          # (tb, kp, H)

    # attention logits: VPU multiply + lane reduce instead of an N=1 MXU matmul.
    logits = jnp.sum(f_a * wa_ref[...], axis=-1)                         # (tb, kp)

    # Padded K columns must not steal probability mass.
    if kp != k_real:
        kmask = lax.broadcasted_iota(jnp.int32, (tb, kp), 1) < k_real
        logits = jnp.where(kmask, logits, -jnp.inf)

    # softmax over K (lane axis).  `ba` cancels here, so it was dropped.
    m = jnp.max(logits, axis=-1, keepdims=True)
    e = jnp.exp(logits - m)
    s = jnp.sum(e, axis=-1, keepdims=True)
    out_ref[...] = (e / s).astype(out_ref.dtype)   # exact divide: rows sum to 1


def top_down_attention(v, q, params, n_objs=None, *, tb=None,
                       weight_dtype=jnp.bfloat16):
    """v: (B,K,V_DIM), q: (B,Q_DIM) -> (B,K,1) f32 softmax attention over K.

    n_objs is accepted for API parity with the PyTorch forward but unused.
    v may be f32 or bf16 (bf16 halves the dominant HBM stream).
    """
    del n_objs  # unused, matching the PyTorch module
    B, K, V_DIM = v.shape
    Q_DIM = q.shape[-1]
    H = params["w1v"].shape[1]
    H2 = 2 * H

    # --- weight prep (once, in XLA) ------------------------------------------
    # Fuse the two gate branches along N for the v matmul; bf16 weights by
    # default (2x MXU throughput, half the resident VMEM), f32 accumulation.
    wv = jnp.concatenate([params["w1v"], params["w2v"]], axis=1).astype(weight_dtype)
    wa_row = params["wa"].reshape(1, H).astype(jnp.float32)

    # Hoist the q branch (and fold the biases) into XLA: tiny (B, 2H) tensor,
    # removes Wq + bias from VMEM and a sliver-sized M=tb matmul from the MXU.
    wq = jnp.concatenate([params["w1q"], params["w2q"]], axis=1).astype(jnp.float32)
    b12 = jnp.concatenate([params["b1"], params["b2"]], axis=1).astype(jnp.float32)
    hq = q.astype(jnp.float32) @ wq + b12                                 # (B, 2H)
    # params["ba"] is a constant logit shift -> cancels in softmax; dropped.

    # --- pad K to a sublane multiple of 8 (layout no-op reshapes in-kernel) ---
    Kp = _round_up(K, 8)
    if Kp != K:
        v = jnp.pad(v, ((0, 0), (0, Kp - K), (0, 0)))

    v_isz = v.dtype.itemsize
    w_bytes = V_DIM * H2 * jnp.dtype(weight_dtype).itemsize + H * 4  # single-buffered

    def footprint(t):
        v_tile = t * Kp * V_DIM * v_isz * 2          # double-buffered v stream
        hq_tile = t * H2 * 4 * 2                     # double-buffered hq stream
        out_tile = t * Kp * 4 * 2                    # double-buffered output
        inter = t * Kp * H2 * 4 * 3                  # hv/pre + (y,g) + f_a (f32)
        return w_bytes + v_tile + hq_tile + out_tile + inter

    # --- batching tile: sized by bytes streamed, tb % 8 == 0 -----------------
    B8 = _round_up(B, 8)
    if tb is None:
        target_v_bytes = 4 << 20                     # ~4 MiB of v per grid step
        tb = max(8, ((target_v_bytes // max(1, Kp * V_DIM * v_isz)) // 8) * 8)
        tb = min(tb, B8)                             # small problems -> grid=(1,)
        budget = 40 << 20                            # conservative per-TC (v7x: 64 MiB phys)
        while tb > 8 and footprint(tb) > budget:
            tb -= 8
    else:
        tb = max(8, _round_up(int(tb), 8))
        tb = min(tb, B8)

    Bp = _round_up(B, tb)
    if Bp != B:                                      # ragged tail: pad, slice off below
        v = jnp.pad(v, ((0, Bp - B), (0, 0), (0, 0)))
        hq = jnp.pad(hq, ((0, Bp - B), (0, 0)))

    vmem_limit = int(footprint(tb) * 1.25) + (2 << 20)
    vmem_limit = max(16 << 20, min(vmem_limit, 48 << 20))

    grid_spec = pltpu.PrefetchScalarGridSpec(
        num_scalar_prefetch=0,
        grid=(Bp // tb,),
        in_specs=[
            # TODO(synk): bump to pl.Buffered(3) if profiling shows the v DMA exposed.
            pl.BlockSpec((tb, Kp, V_DIM), lambda b: (b, 0, 0)),            # v tile
            pl.BlockSpec((tb, H2), lambda b: (b, 0)),                      # hq tile
            pl.BlockSpec((V_DIM, H2), lambda b: (0, 0),
                         pipeline_mode=pl.Buffered(1)),                    # fused Wv (resident)
            pl.BlockSpec((1, H), lambda b: (0, 0),
                         pipeline_mode=pl.Buffered(1)),                    # wa as a row
        ],
        out_specs=pl.BlockSpec((tb, Kp), lambda b: (b, 0)),                # lane-dense output
    )

    att = pl.pallas_call(
        partial(_td_attention_kernel, k_real=K),
        out_shape=jax.ShapeDtypeStruct((Bp, Kp), jnp.float32),
        grid_spec=grid_spec,
        compiler_params=pltpu.CompilerParams(
            dimension_semantics=("parallel",),   # independent batch steps (v7x 2 TCs)
            vmem_limit_bytes=vmem_limit,
        ),
    )(v, hq, wv, wa_row)

    return att[:B, :K].reshape(B, K, 1)


def top_down_attention_ref(v, q, params):
    """Pure-JAX reference mirroring the PyTorch forward exactly (incl. ba)."""
    B, K, _ = v.shape
    q_rep = jnp.broadcast_to(q[:, None, :], (B, K, q.shape[-1]))
    v_q = jnp.concatenate([v, q_rep], axis=2)
    w1 = jnp.concatenate([params["w1v"], params["w1q"]], axis=0)
    w2 = jnp.concatenate([params["w2v"], params["w2q"]], axis=0)
    y = jax.nn.relu(v_q @ w1 + params["b1"])
    g = jax.nn.sigmoid(v_q @ w2 + params["b2"])
    f_a = y * g
    att = f_a @ params["wa"] + params["ba"]
    return jax.nn.softmax(att, axis=1)


def init_params(key, v_dim, q_dim, hidden_dim):
    ks = jax.random.split(key, 6)
    scale = 0.1
    return {
        # Linear1 of GatedMLP, split into v-part and q-part (stored as (in, out))
        "w1v": scale * jax.random.normal(ks[0], (v_dim, hidden_dim), jnp.float32),
        "w1q": scale * jax.random.normal(ks[1], (q_dim, hidden_dim), jnp.float32),
        "b1":  scale * jax.random.normal(ks[2], (1, hidden_dim), jnp.float32),
        # Linear2 of GatedMLP
        "w2v": scale * jax.random.normal(ks[3], (v_dim, hidden_dim), jnp.float32),
        "w2q": scale * jax.random.normal(ks[4], (q_dim, hidden_dim), jnp.float32),
        "b2":  scale * jax.random.normal(ks[5], (1, hidden_dim), jnp.float32),
        # attention_weights: Linear(hidden, 1)
        "wa":  scale * jax.random.normal(jax.random.fold_in(key, 7),
                                         (hidden_dim, 1), jnp.float32),
        "ba":  scale * jnp.ones((1, 1), jnp.float32),
    }


if __name__ == "__main__":
    B, K, V_DIM, Q_DIM, HIDDEN = 8, 8, 16, 16, 32

    key = jax.random.PRNGKey(0)
    kv, kq, kprm = jax.random.split(key, 3)
    v = jax.random.normal(kv, (B, K, V_DIM), jnp.float32)
    q = jax.random.normal(kq, (B, Q_DIM), jnp.float32)
    n_objs = jnp.full((B,), K, jnp.int32)  # unused by forward (matches PyTorch)
    params = init_params(kprm, V_DIM, Q_DIM, HIDDEN)

    att_ref = top_down_attention_ref(v, q, params)

    # f32 weights, auto batching tile (small problem -> grid=(1,)).
    att32 = jax.block_until_ready(
        top_down_attention(v, q, params, n_objs, weight_dtype=jnp.float32))
    assert att32.shape == (B, K, 1)
    assert jnp.allclose(att32, att_ref, atol=2e-3, rtol=2e-3)
    assert jnp.allclose(jnp.sum(att32, axis=1), 1.0, atol=1e-4)

    # Default bf16 weights with v fed as bf16 (halves the dominant HBM stream).
    att16 = jax.block_until_ready(
        top_down_attention(v.astype(jnp.bfloat16), q, params, n_objs))
    assert att16.shape == (B, K, 1)
    assert jnp.allclose(att16, att_ref, atol=3e-2, rtol=3e-2)

    # Ragged batch (B=5) and K not a multiple of 8 (K=12): exercises the
    # B-padding, K-padding and the in-kernel -inf masking before the softmax.
    K2 = 12
    v2 = jax.random.normal(jax.random.fold_in(key, 11), (5, K2, V_DIM), jnp.float32)
    q2 = jax.random.normal(jax.random.fold_in(key, 12), (5, Q_DIM), jnp.float32)
    params2 = init_params(jax.random.fold_in(key, 13), V_DIM, Q_DIM, HIDDEN)
    ref2 = top_down_attention_ref(v2, q2, params2)
    out2 = jax.block_until_ready(
        top_down_attention(v2, q2, params2, None, weight_dtype=jnp.float32))
    assert out2.shape == (5, K2, 1)
    assert jnp.allclose(out2, ref2, atol=2e-3, rtol=2e-3)
    assert jnp.allclose(jnp.sum(out2, axis=1), 1.0, atol=1e-4)

    print("KERNEL_OK")
</pallas_src>

<mosaic_0001>
module attributes {stable_mosaic.version = 11 : i64} {
  func.func @_td_attention_kernel(%arg0: i32, %arg1: memref<8x8x16xf32, #tpu.memory_space<vmem>>, %arg2: memref<8x64xf32, #tpu.memory_space<vmem>>, %arg3: memref<16x64xf32, #tpu.memory_space<vmem>>, %arg4: memref<1x32xf32, #tpu.memory_space<vmem>>, %arg5: memref<8x8xf32, #tpu.memory_space<vmem>>) attributes {dimension_semantics = [#tpu.dimension_semantics<parallel>], iteration_bounds = array<i64: 1>, scalar_prefetch = 0 : i64, scratch_operands = 0 : i64, tpu.core_type = #tpu.core_type<tc>, window_params = [{transform_indices = @transform_0, window_bounds = array<i64: 8, 8, 16>}, {transform_indices = @transform_1, window_bounds = array<i64: 8, 64>}, {pipeline_mode = #tpu.pipeline_mode<synchronous>, transform_indices = @transform_2, window_bounds = array<i64: 16, 64>}, {pipeline_mode = #tpu.pipeline_mode<synchronous>, transform_indices = @transform_3, window_bounds = array<i64: 1, 32>}, {transform_indices = @transform_4, window_bounds = array<i64: 8, 8>}]} {
    %c0 = arith.constant 0 : index
    %c0_0 = arith.constant 0 : index
    %c0_1 = arith.constant 0 : index
    %0 = vector.load %arg1[%c0, %c0_0, %c0_1] : memref<8x8x16xf32, #tpu.memory_space<vmem>>, vector<8x8x16xf32>
    %1 = vector.shape_cast %0 : vector<8x8x16xf32> to vector<64x16xf32>
    %c0_2 = arith.constant 0 : index
    %c0_3 = arith.constant 0 : index
    %2 = vector.load %arg3[%c0_2, %c0_3] : memref<16x64xf32, #tpu.memory_space<vmem>>, vector<16x64xf32>
    %cst = arith.constant dense<0.000000e+00> : vector<64x64xf32>
    %3 = tpu.matmul %1, %2, %cst {dimension_numbers = #tpu.dot_dimension_numbers<[1], [0], [0], [1], [0, 0, 1, 1], [], []>} : vector<64x16xf32>, vector<16x64xf32>, vector<64x64xf32> -> vector<64x64xf32>
    %4 = vector.shape_cast %3 : vector<64x64xf32> to vector<8x8x64xf32>
    %c0_4 = arith.constant 0 : index
    %c0_5 = arith.constant 0 : index
    %5 = vector.load %arg2[%c0_4, %c0_5] : memref<8x64xf32, #tpu.memory_space<vmem>>, vector<8x64xf32>
    %6 = vector.shape_cast %5 : vector<8x64xf32> to vector<8x1x64xf32>
    %7 = vector.broadcast %6 : vector<8x1x64xf32> to vector<8x8x64xf32>
    %8 = arith.addf %4, %7 : vector<8x8x64xf32>
    %9 = vector.extract_strided_slice %8 {offsets = [0, 0, 0], sizes = [8, 8, 32], strides = [1, 1, 1]} : vector<8x8x64xf32> to vector<8x8x32xf32>
    %cst_6 = arith.constant 0.000000e+00 : f32
    %10 = vector.broadcast %cst_6 : f32 to vector<8x8x32xf32>
    %11 = arith.maximumf %9, %10 : vector<8x8x32xf32>
    %12 = vector.extract_strided_slice %8 {offsets = [0, 0, 32], sizes = [8, 8, 32], strides = [1, 1, 1]} : vector<8x8x64xf32> to vector<8x8x32xf32>
    %cst_7 = arith.constant 5.000000e-01 : f32
    %13 = vector.broadcast %cst_7 : f32 to vector<8x8x32xf32>
    %14 = arith.mulf %13, %12 : vector<8x8x32xf32>
    %15 = math.tanh %14 : vector<8x8x32xf32>
    %cst_8 = arith.constant 1.000000e+00 : f32
    %16 = vector.broadcast %cst_8 : f32 to vector<8x8x32xf32>
    %17 = arith.addf %15, %16 : vector<8x8x32xf32>
    %cst_9 = arith.constant 5.000000e-01 : f32
    %18 = vector.broadcast %cst_9 : f32 to vector<8x8x32xf32>
    %19 = arith.mulf %18, %17 : vector<8x8x32xf32>
    %20 = arith.mulf %11, %19 : vector<8x8x32xf32>
    %c0_10 = arith.constant 0 : index
    %c0_11 = arith.constant 0 : index
    %21 = vector.load %arg4[%c0_10, %c0_11] : memref<1x32xf32, #tpu.memory_space<vmem>>, vector<1x32xf32>
    %22 = vector.shape_cast %21 : vector<1x32xf32> to vector<1x1x32xf32>
    %23 = vector.broadcast %22 : vector<1x1x32xf32> to vector<8x8x32xf32>
    %24 = arith.mulf %20, %23 : vector<8x8x32xf32>
    %cst_12 = arith.constant dense<0.000000e+00> : vector<8x8xf32>
    %25 = vector.multi_reduction <add>, %24, %cst_12 [2] : vector<8x8x32xf32> to vector<8x8xf32>
    %cst_13 = arith.constant dense<0xFF800000> : vector<8xf32>
    %26 = vector.multi_reduction <maximumf>, %25, %cst_13 [1] : vector<8x8xf32> to vector<8xf32>
    %27 = vector.shape_cast %26 : vector<8xf32> to vector<8x1xf32>
    %28 = vector.broadcast %27 : vector<8x1xf32> to vector<8x8xf32>
    %29 = arith.subf %25, %28 : vector<8x8xf32>
    %30 = math.exp %29 : vector<8x8xf32>
    %cst_14 = arith.constant dense<0.000000e+00> : vector<8xf32>
    %31 = vector.multi_reduction <add>, %30, %cst_14 [1] : vector<8x8xf32> to vector<8xf32>
    %32 = vector.shape_cast %31 : vector<8xf32> to vector<8x1xf32>
    %33 = vector.broadcast %32 : vector<8x1xf32> to vector<8x8xf32>
    %34 = arith.divf %30, %33 : vector<8x8xf32>
    %c0_15 = arith.constant 0 : index
    %c0_16 = arith.constant 0 : index
    %35 = vector.load %arg5[%c0_15, %c0_16] : memref<8x8xf32, #tpu.memory_space<vmem>>, vector<8x8xf32>
    tpu.vector_store %arg5[%c0_15, %c0_16], %34 {strides = array<i32>} : memref<8x8xf32, #tpu.memory_space<vmem>>, vector<8x8xf32>,
    return
  }
  func.func @transform_0(%arg0: i32) -> (i32, i32, i32) {
    %c0_i32 = arith.constant 0 : i32
    %c0_i32_0 = arith.constant 0 : i32
    %c0_i32_1 = arith.constant 0 : i32
    return %arg0, %c0_i32, %c0_i32_0 : i32, i32, i32
  }
  func.func @transform_1(%arg0: i32) -> (i32, i32) {
    %c0_i32 = arith.constant 0 : i32
    %c0_i32_0 = arith.constant 0 : i32
    return %arg0, %c0_i32 : i32, i32
  }
  func.func @transform_2(%arg0: i32) -> (i32, i32) {
    %c0_i32 = arith.constant 0 : i32
    %c0_i32_0 = arith.constant 0 : i32
    %c0_i32_1 = arith.constant 0 : i32
    return %c0_i32, %c0_i32_0 : i32, i32
  }
  func.func @transform_3(%arg0: i32) -> (i32, i32) {
    %c0_i32 = arith.constant 0 : i32
    %c0_i32_0 = arith.constant 0 : i32
    %c0_i32_1 = arith.constant 0 : i32
    return %c0_i32, %c0_i32_0 : i32, i32
  }
  func.func @transform_4(%arg0: i32) -> (i32, i32) {
    %c0_i32 = arith.constant 0 : i32
    %c0_i32_0 = arith.constant 0 : i32
    return %arg0, %c0_i32 : i32, i32
  }
}

</mosaic_0001>

<llo_original>
// kernel: tpu_custom_call.1
$region0: #{tpu_custom_call.1}
  #allocation0 [shape = 'u32[]', space=smem, size = 0x4, offset = 0x4, fixed_abs, tag = 'smem constant byte address 0x4 - core index']
  #allocation1 [shape = 'u32[144,128]{1,0:T(1,128)}', space=vmem, size = 0x12000, scoped, tag = 'internal scratch']
  %s0 = inlined_call_operand.hbm [shape: f32[8,8,16], index: 0, kind: input, shape index: {}]
  %s1 = inlined_call_operand.hbm [shape: f32[8,64], index: 1, kind: input, shape index: {}]
  %s2 = inlined_call_operand.hbm [shape: f32[16,64], index: 2, kind: input, shape index: {}]
  %s3 = inlined_call_operand.vmem [shape: f32[1,32], index: 3, kind: input, shape index: {}]
  %s4 = inlined_call_operand.hbm [shape: f32[8,8], index: 4, kind: output, shape index: {}]
  %s5 = sld [smem:[#allocation0]]
  $region38: #{tpu_custom_call.1} parent=0
    _
  %s7 = ssub.s32 1, %s5
  %s8 = scalar_select 0, %s7, %s5
  $region1: #{tpu_custom_call.1} parent=0
    #allocation2 [shape = 'u8[32768]{0}', space=vmem, size = 0x8000, scoped, tag = 'input window, operand 0, single buffered']
    #allocation3 [shape = 's32[1]{0}', space=sflag, size = 0x4, scoped, tag = 'scoped memory for tpu_custom_call.1']
    #allocation4 [shape = 's32[1]{0}', space=sflag, size = 0x4, scoped, tag = 'scoped memory for tpu_custom_call.1']
    #allocation5 [shape = 'u8[4096]{0}', space=vmem, size = 0x1000, scoped, tag = 'input window, operand 1, single buffered']
    #allocation6 [shape = 's32[1]{0}', space=sflag, size = 0x4, scoped, tag = 'scoped memory for tpu_custom_call.1']
    #allocation7 [shape = 'u8[8192]{0}', space=vmem, size = 0x2000, scoped, tag = 'input window, operand 2, single buffered']
    #allocation8 [shape = 'u8[4096]{0}', space=vmem, size = 0x1000, scoped, tag = 'output window, operand 0, single buffered']
    %9 = vsyncpa [#allocation3], 0
    %10 = vsyncpa [#allocation6], 0
    %11 = vsyncpa [#allocation4], 0
    // Predicated region
    $region2: #{tpu_custom_call.1} parent=1 // pred_check
      _
    $region3: #{tpu_custom_call.1} parent=1 // pred_check_branch
      %13 = sbr.rel (0) target = $region5
    $region4: #{tpu_custom_call.1} parent=1 // pred_region
      %s15 = ssub.s32 1024, 1024
      %16 = vsyncadd [#allocation3], %s15
      %s17 = sshll.u32 [#allocation2], 4
      %s18 = int_to_ptr.vmem [resolvable:$true] %s17
      %23 = dma.hbm_to_vmem [thread:$0]  %s0, 1024, %s18, [#allocation3], 128, 128, 8
    $region5: #{tpu_custom_call.1} parent=1 // pred_fallthru
      _
    // Predicated region
    $region6: #{tpu_custom_call.1} parent=1 // pred_check
      _
    $region7: #{tpu_custom_call.1} parent=1 // pred_check_branch
      %25 = sbr.rel (0) target = $region9
    $region8: #{tpu_custom_call.1} parent=1 // pred_region
      %s27 = ssub.s32 128, 128
      %28 = vsyncadd [#allocation6], %s27
      %s30 = sshll.u32 [#allocation5], 4
      %s31 = int_to_ptr.vmem [resolvable:$true] %s30
      %33 = dma.hbm_to_vmem [thread:$0]  %s1, 128, %s31, [#allocation6]
    $region9: #{tpu_custom_call.1} parent=1 // pred_fallthru
      _
    // Predicated region
    $region10: #{tpu_custom_call.1} parent=1 // pred_check
      _
    $region11: #{tpu_custom_call.1} parent=1 // pred_check_branch
      %35 = sbr.rel (0) target = $region13
    $region12: #{tpu_custom_call.1} parent=1 // pred_region
      %s37 = ssub.s32 256, 256
      %38 = vsyncadd [#allocation6], %s37
      %s39 = sshll.u32 [#allocation7], 4
      %s40 = int_to_ptr.vmem [resolvable:$true] %s39
      %45 = dma.hbm_to_vmem [thread:$0]  %s2, 256, %s40, [#allocation6], 128, 128, 8
    $region13: #{tpu_custom_call.1} parent=1 // pred_fallthru
      _
    // Predicated region
    $region14: #{tpu_custom_call.1} parent=1 // pred_check
      _
    $region15: #{tpu_custom_call.1} parent=1 // pred_check_branch
      %47 = sbr.rel (0) target = $region17
    $region16: #{tpu_custom_call.1} parent=1 // pred_region
      _
    $region17: #{tpu_custom_call.1} parent=1 // pred_fallthru
      _
    // Predicated region
    $region18: #{tpu_custom_call.1} parent=1 // pred_check
      _
    $region19: #{tpu_custom_call.1} parent=1 // pred_check_branch
      %49 = sbr.rel (0) target = $region21
    $region20: #{tpu_custom_call.1} parent=1 // pred_region
      %50 = dma.done [#allocation3], 1024
    $region21: #{tpu_custom_call.1} parent=1 // pred_fallthru
      _
    // Predicated region
    $region22: #{tpu_custom_call.1} parent=1 // pred_check
      _
    $region23: #{tpu_custom_call.1} parent=1 // pred_check_branch
      %52 = sbr.rel (0) target = $region25
    $region24: #{tpu_custom_call.1} parent=1 // pred_region
      %53 = dma.done [#allocation6], 128
    $region25: #{tpu_custom_call.1} parent=1 // pred_fallthru
      _
    // Predicated region
    $region26: #{tpu_custom_call.1} parent=1 // pred_check
      _
    $region27: #{tpu_custom_call.1} parent=1 // pred_check_branch
      %55 = sbr.rel (0) target = $region29
    $region28: #{tpu_custom_call.1} parent=1 // pred_region
      %56 = dma.done [#allocation6], 256
    $region29: #{tpu_custom_call.1} parent=1 // pred_fallthru
      _
    %v57 = vld [vmem:[#allocation2] sm:$0xff]
    %v58 = vld [vmem:[#allocation2 + $0x8] sm:$0xff]
    %v59 = vld [vmem:[#allocation2 + $0x10] sm:$0xff]
    %v60 = vld [vmem:[#allocation2 + $0x18] sm:$0xff]
    %v61 = vld [vmem:[#allocation2 + $0x20] sm:$0xff]
    %v62 = vld [vmem:[#allocation2 + $0x28] sm:$0xff]
    %v63 = vld [vmem:[#allocation2 + $0x30] sm:$0xff]
    %v64 = vld [vmem:[#allocation2 + $0x38] sm:$0xff]
    %v65 = vld [vmem:[#allocation7] sm:$0xff]
    %v66 = vld [vmem:[#allocation7 + $0x8] sm:$0xff]
    %vm67 = vcmask 130048
    %v69 = vsel %vm67, %v57, 0
    %v72 = vsel %vm67, %v58, 0
    %v75 = vsel %vm67, %v59, 0
    %v78 = vsel %vm67, %v60, 0
    %v81 = vsel %vm67, %v61, 0
    %v84 = vsel %vm67, %v62, 0
    %v87 = vsel %vm67, %v63, 0
    %v90 = vsel %vm67, %v64, 0
    %92 = vmatprep.subr.mxu0 0.0
    %93 = vmatpush1.msra.mxu0 0.0
    %94 = vmatprep.subr.mxu0 0.0
    %95 = vmatpush1.msra.mxu0 0.0
    %96 = vmatprep.subr.mxu0 0.0
    %97 = vmatpush1.msra.mxu0 0.0
    %98 = vmatprep.subr.mxu0 0.0
    %99 = vmatpush1.msra.mxu0 0.0
    %100 = vmatprep.subr.mxu0 0.0
    %101 = vmatpush1.msra.mxu0 0.0
    %102 = vmatprep.subr.mxu0 0.0
    %103 = vmatpush1.msra.mxu0 0.0
    %104 = vmatprep.subr.mxu0 0.0
    %105 = vmatpush1.msra.mxu0 0.0
    %106 = vmatprep.subr.mxu0 0.0
    %107 = vmatpush1.msra.mxu0 0.0
    %108 = vmatprep.subr.mxu0 0.0
    %109 = vmatpush1.msra.mxu0 0.0
    %110 = vmatprep.subr.mxu0 0.0
    %111 = vmatpush1.msra.mxu0 0.0
    %112 = vmatprep.subr.mxu0 0.0
    %113 = vmatpush1.msra.mxu0 0.0
    %114 = vmatprep.subr.mxu0 0.0
    %115 = vmatpush1.msra.mxu0 0.0
    %116 = vmatprep.subr.mxu0 0.0
    %117 = vmatpush1.msra.mxu0 0.0
    %118 = vmatprep.subr.mxu0 0.0
    %119 = vmatpush1.msra.mxu0 0.0
    %120 = vmatprep.subr.mxu0 0.0
    %121 = vmatpush1.msra.mxu0 %v66
    %122 = vmatprep.subr.mxu0 0.0
    %123 = vmatpush1.msra.mxu0 %v65
    %124 = vmatprep.subr.mxu0 0.0
    %125 = vmatpush2.msra.mxu0 0.0
    %126 = vmatprep.subr.mxu0 0.0
    %127 = vmatpush2.msra.mxu0 0.0
    %128 = vmatprep.subr.mxu0 0.0
    %129 = vmatpush2.msra.mxu0 0.0
    %130 = vmatprep.subr.mxu0 0.0
    %131 = vmatpush2.msra.mxu0 0.0
    %132 = vmatprep.subr.mxu0 0.0
    %133 = vmatpush2.msra.mxu0 0.0
    %134 = vmatprep.subr.mxu0 0.0
    %135 = vmatpush2.msra.mxu0 0.0
    %136 = vmatprep.subr.mxu0 0.0
    %137 = vmatpush2.msra.mxu0 0.0
    %138 = vmatprep.subr.mxu0 0.0
    %139 = vmatpush2.msra.mxu0 0.0
    %140 = vmatprep.subr.mxu0 0.0
    %141 = vmatpush2.msra.mxu0 0.0
    %142 = vmatprep.subr.mxu0 0.0
    %143 = vmatpush2.msra.mxu0 0.0
    %144 = vmatprep.subr.mxu0 0.0
    %145 = vmatpush2.msra.mxu0 0.0
    %146 = vmatprep.subr.mxu0 0.0
    %147 = vmatpush2.msra.mxu0 0.0
    %148 = vmatprep.subr.mxu0 0.0
    %149 = vmatpush2.msra.mxu0 0.0
    %150 = vmatprep.subr.mxu0 0.0
    %151 = vmatpush2.msra.mxu0 0.0
    %152 = vmatprep.subr.mxu0 0.0
    %153 = vmatpush2.msra.mxu0 0.0
    %154 = vmatprep.subr.mxu0 0.0
    %155 = vmatpush2.msra.mxu0 0.0
    %156 = vmatprep.mubr.f32.mxu0 0.0
    %157 = vmatmul.mubr.f32.gmra.mxu0 %v69
    %v158 = vpop.f32.mrf.mxu0
    %v159 = vadd.f32 0.0, %v158
    %v160 = vpop.f32.mrf.mxu0
    %161 = vmatprep.mubr.f32.mxu0 0.0
    %162 = vmatmul.mubr.f32.gmra.mxu0 %v72
    %v163 = vpop.f32.mrf.mxu0
    %v164 = vadd.f32 0.0, %v163
    %v165 = vpop.f32.mrf.mxu0
    %166 = vmatprep.mubr.f32.mxu0 0.0
    %167 = vmatmul.mubr.f32.gmra.mxu0 %v75
    %v168 = vpop.f32.mrf.mxu0
    %v169 = vadd.f32 0.0, %v168
    %v170 = vpop.f32.mrf.mxu0
    %171 = vmatprep.mubr.f32.mxu0 0.0
    %172 = vmatmul.mubr.f32.gmra.mxu0 %v78
    %v173 = vpop.f32.mrf.mxu0
    %v174 = vadd.f32 0.0, %v173
    %v175 = vpop.f32.mrf.mxu0
    %176 = vmatprep.mubr.f32.mxu0 0.0
    %177 = vmatmul.mubr.f32.gmra.mxu0 %v81
    %v178 = vpop.f32.mrf.mxu0
    %v179 = vadd.f32 0.0, %v178
    %v180 = vpop.f32.mrf.mxu0
    %181 = vmatprep.mubr.f32.mxu0 0.0
    %182 = vmatmul.mubr.f32.gmra.mxu0 %v84
    %v183 = vpop.f32.mrf.mxu0
    %v184 = vadd.f32 0.0, %v183
    %v185 = vpop.f32.mrf.mxu0
    %186 = vmatprep.mubr.f32.mxu0 0.0
    %187 = vmatmul.mubr.f32.gmra.mxu0 %v87
    %v188 = vpop.f32.mrf.mxu0
    %v189 = vadd.f32 0.0, %v188
    %v190 = vpop.f32.mrf.mxu0
    %191 = vmatprep.mubr.f32.mxu0 0.0
    %192 = vmatmul.mubr.f32.gmra.mxu0 %v90
    %v193 = vpop.f32.mrf.mxu0
    %v194 = vadd.f32 0.0, %v193
    %v195 = vpop.f32.mrf.mxu0
    %196 = vdwg.mxu0
    %v197 = vld [vmem:[#allocation5] sm:$0xff]
    %v199 = vcombine.high %v197, %v197
    %v201 = vunpack.c.l.s4 1966171168
    %v202 = vunpack.c.0.s8 %v201
    %v203 = vlaneseq
    %v204 = vshrl.u32 %v203, 7
    %v205 = vsub.s32 %v202, %v204
    %v206 = vrot.slane %v197, %v205
    %v208 = vunpack.c.l.s4 1966171168
    %v209 = vunpack.c.0.s8 %v208
    %v210 = vlaneseq
    %v211 = vshrl.u32 %v210, 7
    %v212 = vsub.s32 %v209, %v211
    %v213 = vrot.slane %v199, %v212
    %v214 = vcombine.high %v206, %v206
    %v215 = vcombine.high %v213, %v213
    %v217 = vunpack.c.l.s4 1966171168
    %v218 = vunpack.c.0.s8 %v217
    %v219 = vlaneseq
    %v220 = vshrl.u32 %v219, 7
    %v221 = vsub.s32 %v218, %v220
    %v222 = vrot.slane %v206, %v221
    %v224 = vunpack.c.l.s4 1966171168
    %v225 = vunpack.c.0.s8 %v224
    %v226 = vlaneseq
    %v227 = vshrl.u32 %v226, 7
    %v228 = vsub.s32 %v225, %v227
    %v229 = vrot.slane %v213, %v228
    %v231 = vunpack.c.l.s4 1966171168
    %v232 = vunpack.c.0.s8 %v231
    %v233 = vlaneseq
    %v234 = vshrl.u32 %v233, 7
    %v235 = vsub.s32 %v232, %v234
    %v236 = vrot.slane %v214, %v235
    %v238 = vunpack.c.l.s4 1966171168
    %v239 = vunpack.c.0.s8 %v238
    %v240 = vlaneseq
    %v241 = vshrl.u32 %v240, 7
    %v242 = vsub.s32 %v239, %v241
    %v243 = vrot.slane %v215, %v242
    %v244 = vcombine.high %v222, %v222
    %v245 = vcombine.high %v229, %v229
    %v246 = vcombine.high %v236, %v236
    %v247 = vcombine.high %v243, %v243
    %v248 = vlaneseq
    %v249 = vshrl.u32 %v248, 7
    %v250 = vsub.s32 0, %v249
    %v251 = vrot.slane %v222, %v250
    %v252 = vlaneseq
    %v253 = vshrl.u32 %v252, 7
    %v254 = vsub.s32 0, %v253
    %v255 = vrot.slane %v236, %v254
    %v256 = vlaneseq
    %v257 = vshrl.u32 %v256, 7
    %v258 = vsub.s32 0, %v257
    %v259 = vrot.slane %v244, %v258
    %v260 = vlaneseq
    %v261 = vshrl.u32 %v260, 7
    %v262 = vsub.s32 0, %v261
    %v263 = vrot.slane %v246, %v262
    %v264 = vlaneseq
    %v265 = vshrl.u32 %v264, 7
    %v266 = vsub.s32 0, %v265
    %v267 = vrot.slane %v229, %v266
    %v268 = vlaneseq
    %v269 = vshrl.u32 %v268, 7
    %v270 = vsub.s32 0, %v269
    %v271 = vrot.slane %v243, %v270
    %v272 = vlaneseq
    %v273 = vshrl.u32 %v272, 7
    %v274 = vsub.s32 0, %v273
    %v275 = vrot.slane %v245, %v274
    %v276 = vlaneseq
    %v277 = vshrl.u32 %v276, 7
    %v278 = vsub.s32 0, %v277
    %v279 = vrot.slane %v247, %v278
    %v288 = vadd.f32 %v159, %v251
    %v289 = vadd.f32 %v164, %v255
    %v290 = vadd.f32 %v169, %v259
    %v291 = vadd.f32 %v174, %v263
    %v292 = vadd.f32 %v179, %v267
    %v293 = vadd.f32 %v184, %v271
    %v294 = vadd.f32 %v189, %v275
    %v295 = vadd.f32 %v194, %v279
    %v296 = vmax.f32 %v288, 0.0
    %v297 = vmax.f32 %v289, 0.0
    %v298 = vmax.f32 %v290, 0.0
    %v299 = vmax.f32 %v291, 0.0
    %v300 = vmax.f32 %v292, 0.0
    %v301 = vmax.f32 %v293, 0.0
    %v302 = vmax.f32 %v294, 0.0
    %v303 = vmax.f32 %v295, 0.0
    %v304 = vmul.f32 %v288, 0.5
    %v305 = vmul.f32 %v289, 0.5
    %v306 = vmul.f32 %v290, 0.5
    %v307 = vmul.f32 %v291, 0.5
    %v308 = vmul.f32 %v292, 0.5
    %v309 = vmul.f32 %v293, 0.5
    %v310 = vmul.f32 %v294, 0.5
    %v311 = vmul.f32 %v295, 0.5
    %v312 = vtanh.pop %v304
    %v313 = vtanh.pop %v305
    %v314 = vtanh.pop %v306
    %v315 = vtanh.pop %v307
    %v316 = vtanh.pop %v308
    %v317 = vtanh.pop %v309
    %v318 = vtanh.pop %v310
    %v319 = vtanh.pop %v311
    %v320 = vadd.f32 %v312, 1.0
    %v321 = vadd.f32 %v313, 1.0
    %v322 = vadd.f32 %v314, 1.0
    %v323 = vadd.f32 %v315, 1.0
    %v324 = vadd.f32 %v316, 1.0
    %v325 = vadd.f32 %v317, 1.0
    %v326 = vadd.f32 %v318, 1.0
    %v327 = vadd.f32 %v319, 1.0
    %v328 = vmul.f32 %v320, 0.5
    %v329 = vmul.f32 %v321, 0.5
    %v330 = vmul.f32 %v322, 0.5
    %v331 = vmul.f32 %v323, 0.5
    %v332 = vmul.f32 %v324, 0.5
    %v333 = vmul.f32 %v325, 0.5
    %v334 = vmul.f32 %v326, 0.5
    %v335 = vmul.f32 %v327, 0.5
    %344 = vrot.lane.b32.xlu0 %v328, 96
    %v345 = vpop.permute.xlu0 %344
    %346 = vrot.lane.b32.xlu0 %v329, 96
    %v347 = vpop.permute.xlu0 %346
    %348 = vrot.lane.b32.xlu0 %v330, 96
    %v349 = vpop.permute.xlu0 %348
    %350 = vrot.lane.b32.xlu0 %v331, 96
    %v351 = vpop.permute.xlu0 %350
    %352 = vrot.lane.b32.xlu0 %v332, 96
    %v353 = vpop.permute.xlu0 %352
    %354 = vrot.lane.b32.xlu0 %v333, 96
    %v355 = vpop.permute.xlu0 %354
    %356 = vrot.lane.b32.xlu0 %v334, 96
    %v357 = vpop.permute.xlu0 %356
    %358 = vrot.lane.b32.xlu0 %v335, 96
    %v359 = vpop.permute.xlu0 %358
    %v368 = vmul.f32 %v296, %v345
    %v369 = vmul.f32 %v297, %v347
    %v370 = vmul.f32 %v298, %v349
    %v371 = vmul.f32 %v299, %v351
    %v372 = vmul.f32 %v300, %v353
    %v373 = vmul.f32 %v301, %v355
    %v374 = vmul.f32 %v302, %v357
    %v375 = vmul.f32 %v303, %v359
    %v376 = vld [vmem:[%s3] sm:$0x1]
    %v378 = vlaneseq
    %v379 = vshrl.u32 %v378, 7
    %v380 = vsub.s32 0, %v379
    %v381 = vrot.slane %v376, %v380
    %v383 = vmul.f32 %v368, %v381
    %v384 = vmul.f32 %v369, %v381
    %v385 = vmul.f32 %v370, %v381
    %v386 = vmul.f32 %v371, %v381
    %v387 = vmul.f32 %v372, %v381
    %v388 = vmul.f32 %v373, %v381
    %v389 = vmul.f32 %v374, %v381
    %v390 = vmul.f32 %v375, %v381
    %vm391 = vcmask 261120
    %v392 = vsel %vm391, %v383, 0.0
    %393 = vadd.xlane.f32.xlu0 %v392
    %v394 = vpop.xlane.xlu0 %393
    %v395 = vsel %vm391, %v384, 0.0
    %396 = vadd.xlane.f32.xlu0 %v395
    %v397 = vpop.xlane.xlu0 %396
    %v398 = vsel %vm391, %v385, 0.0
    %399 = vadd.xlane.f32.xlu0 %v398
    %v400 = vpop.xlane.xlu0 %399
    %v401 = vsel %vm391, %v386, 0.0
    %402 = vadd.xlane.f32.xlu0 %v401
    %v403 = vpop.xlane.xlu0 %402
    %v404 = vsel %vm391, %v387, 0.0
    %405 = vadd.xlane.f32.xlu0 %v404
    %v406 = vpop.xlane.xlu0 %405
    %v407 = vsel %vm391, %v388, 0.0
    %408 = vadd.xlane.f32.xlu0 %v407
    %v409 = vpop.xlane.xlu0 %408
    %v410 = vsel %vm391, %v389, 0.0
    %411 = vadd.xlane.f32.xlu0 %v410
    %v412 = vpop.xlane.xlu0 %411
    %v413 = vsel %vm391, %v390, 0.0
    %414 = vadd.xlane.f32.xlu0 %v413
    %v415 = vpop.xlane.xlu0 %414
    %v424 = vlaneseq
    %v425 = vand.u32 %v424, 127
    %v426 = vlaneseq
    %v427 = vshrl.u32 %v426, 7
    %v428 = vsub.s32 %v425, %v427
    %v429 = vrot.slane %v394, %v428
    %v430 = vlaneseq
    %v431 = vshrl.u32 %v430, 7
    %v432 = vsub.s32 %v425, %v431
    %v433 = vrot.slane %v397, %v432
    %v434 = vlaneseq
    %v435 = vshrl.u32 %v434, 7
    %v436 = vsub.s32 %v425, %v435
    %v437 = vrot.slane %v400, %v436
    %v438 = vlaneseq
    %v439 = vshrl.u32 %v438, 7
    %v440 = vsub.s32 %v425, %v439
    %v441 = vrot.slane %v403, %v440
    %v442 = vlaneseq
    %v443 = vshrl.u32 %v442, 7
    %v444 = vsub.s32 %v425, %v443
    %v445 = vrot.slane %v406, %v444
    %v446 = vlaneseq
    %v447 = vshrl.u32 %v446, 7
    %v448 = vsub.s32 %v425, %v447
    %v449 = vrot.slane %v409, %v448
    %v450 = vlaneseq
    %v451 = vshrl.u32 %v450, 7
    %v452 = vsub.s32 %v425, %v451
    %v453 = vrot.slane %v412, %v452
    %v454 = vlaneseq
    %v455 = vshrl.u32 %v454, 7
    %v456 = vsub.s32 %v425, %v455
    %v457 = vrot.slane %v415, %v456
    %vm458 = vcmask 1041409
    %v459 = vsel %vm458, %v433, %v429
    %vm460 = vcmask 1042434
    %v461 = vsel %vm460, %v437, %v459
    %vm462 = vcmask 1043459
    %v463 = vsel %vm462, %v441, %v461
    %vm464 = vcmask 1044484
    %v465 = vsel %vm464, %v445, %v463
    %vm466 = vcmask 1045509
    %v467 = vsel %vm466, %v449, %v465
    %vm468 = vcmask 1046534
    %v469 = vsel %vm468, %v453, %v467
    %vm470 = vcmask 1047559
    %v471 = vsel %vm470, %v457, %v469
    %vm473 = vcmask 64512
    %v474 = vsel %vm473, %v471, -inf
    %475 = vmax.xlane.f32.xlu0 %v474
    %v476 = vpop.xlane.xlu0 %475
    %v478 = vlaneseq
    %v479 = vshrl.u32 %v478, 7
    %v480 = vsub.s32 0, %v479
    %v481 = vrot.slane %v476, %v480
    %v482 = vlaneseq
    %v483 = vshrl.u32 %v482, 7
    %v484 = vsub.s32 1, %v483
    %v485 = vrot.slane %v476, %v484
    %v486 = vlaneseq
    %v487 = vshrl.u32 %v486, 7
    %v488 = vsub.s32 2, %v487
    %v489 = vrot.slane %v476, %v488
    %v490 = vlaneseq
    %v491 = vshrl.u32 %v490, 7
    %v492 = vsub.s32 3, %v491
    %v493 = vrot.slane %v476, %v492
    %v494 = vlaneseq
    %v495 = vshrl.u32 %v494, 7
    %v496 = vsub.s32 4, %v495
    %v497 = vrot.slane %v476, %v496
    %v498 = vlaneseq
    %v499 = vshrl.u32 %v498, 7
    %v500 = vsub.s32 5, %v499
    %v501 = vrot.slane %v476, %v500
    %v502 = vlaneseq
    %v503 = vshrl.u32 %v502, 7
    %v504 = vsub.s32 6, %v503
    %v505 = vrot.slane %v476, %v504
    %v506 = vlaneseq
    %v507 = vshrl.u32 %v506, 7
    %v508 = vsub.s32 7, %v507
    %v509 = vrot.slane %v476, %v508
    %v518 = vsub.f32 %v394, %v481
    %v519 = vsub.f32 %v397, %v485
    %v520 = vsub.f32 %v400, %v489
    %v521 = vsub.f32 %v403, %v493
    %v522 = vsub.f32 %v406, %v497
    %v523 = vsub.f32 %v409, %v501
    %v524 = vsub.f32 %v412, %v505
    %v525 = vsub.f32 %v415, %v509
    %v526 = vmul.f32 %v518, 1.442695
    %v527 = vpow.pop %v526
    %v528 = vmul.f32 %v519, 1.442695
    %v529 = vpow.pop %v528
    %v530 = vmul.f32 %v520, 1.442695
    %v531 = vpow.pop %v530
    %v532 = vmul.f32 %v521, 1.442695
    %v533 = vpow.pop %v532
    %v534 = vmul.f32 %v522, 1.442695
    %v535 = vpow.pop %v534
    %v536 = vmul.f32 %v523, 1.442695
    %v537 = vpow.pop %v536
    %v538 = vmul.f32 %v524, 1.442695
    %v539 = vpow.pop %v538
    %v540 = vmul.f32 %v525, 1.442695
    %v541 = vpow.pop %v540
    %550 = vset.pattern.permute.xlu0 0
    %551 = vperm.xlu0 %550, %v527
    %v552 = vpop.permute.xlu0 %551
    %553 = vset.pattern.permute.xlu0 0
    %554 = vperm.xlu0 %553, %v529
    %v555 = vpop.permute.xlu0 %554
    %556 = vset.pattern.permute.xlu0 0
    %557 = vperm.xlu0 %556, %v531
    %v558 = vpop.permute.xlu0 %557
    %559 = vset.pattern.permute.xlu0 0
    %560 = vperm.xlu0 %559, %v533
    %v561 = vpop.permute.xlu0 %560
    %562 = vset.pattern.permute.xlu0 0
    %563 = vperm.xlu0 %562, %v535
    %v564 = vpop.permute.xlu0 %563
    %565 = vset.pattern.permute.xlu0 0
    %566 = vperm.xlu0 %565, %v537
    %v567 = vpop.permute.xlu0 %566
    %568 = vset.pattern.permute.xlu0 0
    %569 = vperm.xlu0 %568, %v539
    %v570 = vpop.permute.xlu0 %569
    %571 = vset.pattern.permute.xlu0 0
    %572 = vperm.xlu0 %571, %v541
    %v573 = vpop.permute.xlu0 %572
    %v574 = vlaneseq
    %v575 = vshrl.u32 %v574, 7
    %v576 = vsub.s32 %v425, %v575
    %v577 = vrot.slane %v552, %v576
    %v578 = vlaneseq
    %v579 = vshrl.u32 %v578, 7
    %v580 = vsub.s32 %v425, %v579
    %v581 = vrot.slane %v555, %v580
    %v582 = vlaneseq
    %v583 = vshrl.u32 %v582, 7
    %v584 = vsub.s32 %v425, %v583
    %v585 = vrot.slane %v558, %v584
    %v586 = vlaneseq
    %v587 = vshrl.u32 %v586, 7
    %v588 = vsub.s32 %v425, %v587
    %v589 = vrot.slane %v561, %v588
    %v590 = vlaneseq
    %v591 = vshrl.u32 %v590, 7
    %v592 = vsub.s32 %v425, %v591
    %v593 = vrot.slane %v564, %v592
    %v594 = vlaneseq
    %v595 = vshrl.u32 %v594, 7
    %v596 = vsub.s32 %v425, %v595
    %v597 = vrot.slane %v567, %v596
    %v598 = vlaneseq
    %v599 = vshrl.u32 %v598, 7
    %v600 = vsub.s32 %v425, %v599
    %v601 = vrot.slane %v570, %v600
    %v602 = vlaneseq
    %v603 = vshrl.u32 %v602, 7
    %v604 = vsub.s32 %v425, %v603
    %v605 = vrot.slane %v573, %v604
    %v606 = vsel %vm458, %v581, %v577
    %v607 = vsel %vm460, %v585, %v606
    %v608 = vsel %vm462, %v589, %v607
    %v609 = vsel %vm464, %v593, %v608
    %v610 = vsel %vm466, %v597, %v609
    %v611 = vsel %vm468, %v601, %v610
    %v612 = vsel %vm470, %v605, %v611
    %v614 = vsel %vm473, %v612, 0.0
    %615 = vadd.xlane.f32.xlu0 %v614
    %v616 = vpop.xlane.xlu0 %615
    %v618 = vlaneseq
    %v619 = vshrl.u32 %v618, 7
    %v620 = vsub.s32 0, %v619
    %v621 = vrot.slane %v616, %v620
    %v622 = vlaneseq
    %v623 = vshrl.u32 %v622, 7
    %v624 = vsub.s32 1, %v623
    %v625 = vrot.slane %v616, %v624
    %v626 = vlaneseq
    %v627 = vshrl.u32 %v626, 7
    %v628 = vsub.s32 2, %v627
    %v629 = vrot.slane %v616, %v628
    %v630 = vlaneseq
    %v631 = vshrl.u32 %v630, 7
    %v632 = vsub.s32 3, %v631
    %v633 = vrot.slane %v616, %v632
    %v634 = vlaneseq
    %v635 = vshrl.u32 %v634, 7
    %v636 = vsub.s32 4, %v635
    %v637 = vrot.slane %v616, %v636
    %v638 = vlaneseq
    %v639 = vshrl.u32 %v638, 7
    %v640 = vsub.s32 5, %v639
    %v641 = vrot.slane %v616, %v640
    %v642 = vlaneseq
    %v643 = vshrl.u32 %v642, 7
    %v644 = vsub.s32 6, %v643
    %v645 = vrot.slane %v616, %v644
    %v646 = vlaneseq
    %v647 = vshrl.u32 %v646, 7
    %v648 = vsub.s32 7, %v647
    %v649 = vrot.slane %v616, %v648
    %v658 = vrcp.pop %v621
    %v659 = vmul.f32 %v527, %v658
    %v660 = vrcp.pop %v625
    %v661 = vmul.f32 %v529, %v660
    %v662 = vrcp.pop %v629
    %v663 = vmul.f32 %v531, %v662
    %v664 = vrcp.pop %v633
    %v665 = vmul.f32 %v533, %v664
    %v666 = vrcp.pop %v637
    %v667 = vmul.f32 %v535, %v666
    %v668 = vrcp.pop %v641
    %v669 = vmul.f32 %v537, %v668
    %v670 = vrcp.pop %v645
    %v671 = vmul.f32 %v539, %v670
    %v672 = vrcp.pop %v649
    %v673 = vmul.f32 %v541, %v672
    %682 = vset.pattern.permute.xlu0 0
    %683 = vperm.xlu0 %682, %v659
    %v684 = vpop.permute.xlu0 %683
    %685 = vset.pattern.permute.xlu0 0
    %686 = vperm.xlu0 %685, %v661
    %v687 = vpop.permute.xlu0 %686
    %688 = vset.pattern.permute.xlu0 0
    %689 = vperm.xlu0 %688, %v663
    %v690 = vpop.permute.xlu0 %689
    %691 = vset.pattern.permute.xlu0 0
    %692 = vperm.xlu0 %691, %v665
    %v693 = vpop.permute.xlu0 %692
    %694 = vset.pattern.permute.xlu0 0
    %695 = vperm.xlu0 %694, %v667
    %v696 = vpop.permute.xlu0 %695
    %697 = vset.pattern.permute.xlu0 0
    %698 = vperm.xlu0 %697, %v669
    %v699 = vpop.permute.xlu0 %698
    %700 = vset.pattern.permute.xlu0 0
    %701 = vperm.xlu0 %700, %v671
    %v702 = vpop.permute.xlu0 %701
    %703 = vset.pattern.permute.xlu0 0
    %704 = vperm.xlu0 %703, %v673
    %v705 = vpop.permute.xlu0 %704
    %v706 = vlaneseq
    %v707 = vshrl.u32 %v706, 7
    %v708 = vsub.s32 %v425, %v707
    %v709 = vrot.slane %v684, %v708
    %v710 = vlaneseq
    %v711 = vshrl.u32 %v710, 7
    %v712 = vsub.s32 %v425, %v711
    %v713 = vrot.slane %v687, %v712
    %v714 = vlaneseq
    %v715 = vshrl.u32 %v714, 7
    %v716 = vsub.s32 %v425, %v715
    %v717 = vrot.slane %v690, %v716
    %v718 = vlaneseq
    %v719 = vshrl.u32 %v718, 7
    %v720 = vsub.s32 %v425, %v719
    %v721 = vrot.slane %v693, %v720
    %v722 = vlaneseq
    %v723 = vshrl.u32 %v722, 7
    %v724 = vsub.s32 %v425, %v723
    %v725 = vrot.slane %v696, %v724
    %v726 = vlaneseq
    %v727 = vshrl.u32 %v726, 7
    %v728 = vsub.s32 %v425, %v727
    %v729 = vrot.slane %v699, %v728
    %v730 = vlaneseq
    %v731 = vshrl.u32 %v730, 7
    %v732 = vsub.s32 %v425, %v731
    %v733 = vrot.slane %v702, %v732
    %v734 = vlaneseq
    %v735 = vshrl.u32 %v734, 7
    %v736 = vsub.s32 %v425, %v735
    %v737 = vrot.slane %v705, %v736
    %v738 = vsel %vm458, %v713, %v709
    %v739 = vsel %vm460, %v717, %v738
    %v740 = vsel %vm462, %v721, %v739
    %v741 = vsel %vm464, %v725, %v740
    %v742 = vsel %vm466, %v729, %v741
    %v743 = vsel %vm468, %v733, %v742
    %v744 = vsel %vm470, %v737, %v743
    %746 = vst.msk [vmem:[#allocation8] sm:$0xff] %vm473, %v744
    // Predicated region
    $region30: #{tpu_custom_call.1} parent=1 // pred_check
      _
    $region31: #{tpu_custom_call.1} parent=1 // pred_check_branch
      %748 = sbr.rel (0) target = $region33
    $region32: #{tpu_custom_call.1} parent=1 // pred_region
      %s750 = ssub.s32 128, 128
      %751 = vsyncadd [#allocation4], %s750
      %s753 = sshll.u32 [#allocation8], 4
      %s754 = int_to_ptr.vmem [resolvable:$true] %s753
      %756 = dma.vmem_to_hbm [thread:$0]  %s754, 128, %s4, [#allocation4]
    $region33: #{tpu_custom_call.1} parent=1 // pred_fallthru
      _
    // Predicated region
    $region34: #{tpu_custom_call.1} parent=1 // pred_check
      _
    $region35: #{tpu_custom_call.1} parent=1 // pred_check_branch
      %758 = sbr.rel (0) target = $region37
    $region36: #{tpu_custom_call.1} parent=1 // pred_region
      %759 = dma.done [#allocation4], 128
    $region37: #{tpu_custom_call.1} parent=1 // pred_fallthru
      _
    %760 = vsyncpa [#allocation3], 1
    %761 = vsyncpa [#allocation6], 1
    %762 = vsyncpa [#allocation4], 1

</llo_original>
